<compile_context>
chip_gen: v7x
topology: tpu7x:2x2x1
jax: 0.10.0
libtpu: 0.0.40
codegen_flags: <defaults>
</compile_context>

<pallas_src>
import functools
import math

import numpy as np
import jax
import jax.numpy as jnp
from jax.experimental import pallas as pl
from jax.experimental.pallas import tpu as pltpu


# ----------------------------------------------------------------------------
# numerically-stable helpers usable inside Pallas kernels (f32)
# ----------------------------------------------------------------------------
def _softplus(x):
    # matches torch.nn.functional.softplus (stable form)
    return jnp.maximum(x, 0.0) + jnp.log(1.0 + jnp.exp(-jnp.abs(x)))


def _sigmoid(x):
    return 1.0 / (1.0 + jnp.exp(-x))


def _pick_tile(total, max_tile):
    """Largest lane tile (multiple of 128, <= max_tile) that divides `total`,
    preferring >= 2 tiles along that axis so v7x's two TensorCores both get work."""
    for cand in (4096, 2048, 1024, 512, 256, 128):
        if cand <= max_tile and cand <= total and total % cand == 0:
            if cand == total and total > 128:
                continue  # prefer >= 2 tiles when possible (megacore)
            return cand
    return 128


# ----------------------------------------------------------------------------
# Pallas kernel 1: decoder MLP (transposed: rows on the 128-lane axis)
# ----------------------------------------------------------------------------
def _decoder_mlp_kernel(x_ref, w1_ref, b1_ref, w2_ref, b2_ref, o_ref):
    x = x_ref[0]                                                        # (Fp, TM) bf16
    h = jnp.dot(w1_ref[...], x, preferred_element_type=jnp.float32) + b1_ref[...]
    h = _softplus(h)                                                    # (HP, TM) f32
    y = jnp.dot(w2_ref[...], h.astype(jnp.bfloat16),
                preferred_element_type=jnp.float32) + b2_ref[...]       # (OP, TM) f32
    # row 0 -> raw sigma ; rows 1.. -> sigmoid(rgb)*(1+2*0.001)-0.001 (OSGDecoder)
    act = _sigmoid(y) * (1.0 + 2.0 * 0.001) - 0.001
    row = jax.lax.broadcasted_iota(jnp.int32, y.shape, 0)
    o_ref[0] = jnp.where(row == 0, y, act)


def decoder_mlp_pallas(feat, W1, b1, W2, b2):
    """feat: (B, C, M) plane-mean features, M a multiple of 128 (rows on lanes).
    Returns (B, 8, M) f32: row 0 = raw sigma, rows 1..3 = sigmoid-scaled rgb."""
    B, C, M = feat.shape
    Cin, Hd = W1.shape
    assert C == Cin
    O = W2.shape[1]

    Fp = ((C + 7) // 8) * 8        # feature dim on sublanes: pad to 8 only
    HP = ((Hd + 7) // 8) * 8       # hidden on sublanes: pad to 8 (no wasted EUP lanes)
    OP = 8                         # small sublane-aligned output slab (4 useful rows)
    TM = _pick_tile(M, 2048)       # big lane tile; intermediates stay spill-friendly

    # NOTE: bf16 activations/weights on the MXU; sigma is a raw logit so keep the
    # accumulation + epilogue in f32 (validated vs f32 reference at loose tolerance).
    xp = feat.astype(jnp.bfloat16)
    if Fp != C:
        xp = jnp.pad(xp, ((0, 0), (0, Fp - C), (0, 0)))
    W1p = jnp.zeros((HP, Fp), jnp.float32).at[:Hd, :C].set(W1.T).astype(jnp.bfloat16)
    b1p = jnp.zeros((HP, 1), jnp.float32).at[:Hd, 0].set(b1)
    W2p = jnp.zeros((OP, HP), jnp.float32).at[:O, :Hd].set(W2.T).astype(jnp.bfloat16)
    b2p = jnp.zeros((OP, 1), jnp.float32).at[:O, 0].set(b2)

    out = pl.pallas_call(
        _decoder_mlp_kernel,
        out_shape=jax.ShapeDtypeStruct((B, OP, M), jnp.float32),
        grid=(B, M // TM),
        in_specs=[
            pl.BlockSpec((1, Fp, TM), lambda b, i: (b, 0, i)),
            pl.BlockSpec((HP, Fp), lambda b, i: (0, 0)),
            pl.BlockSpec((HP, 1), lambda b, i: (0, 0)),
            pl.BlockSpec((OP, HP), lambda b, i: (0, 0)),
            pl.BlockSpec((OP, 1), lambda b, i: (0, 0)),
        ],
        out_specs=pl.BlockSpec((1, OP, TM), lambda b, i: (b, 0, i)),
        compiler_params=pltpu.CompilerParams(
            dimension_semantics=("parallel", "parallel")),
    )(xp, W1p, b1p, W2p, b2p)
    return out                                                         # (B, 8, M)


# ----------------------------------------------------------------------------
# Pallas kernel 2: MipRayMarcher2 compositing (rays on the 128-lane axis)
# ----------------------------------------------------------------------------
def _ray_march_kernel(colors_ref, dd_ref, rgb_ref, depth_ref, w_ref, *, white_back):
    dd = dd_ref[0]                               # (2, S, TR): [density, depth]
    dens = dd[0]                                 # (S, TR)
    dep = dd[1]                                  # (S, TR)

    deltas = dep[1:, :] - dep[:-1, :]                            # (S-1, TR)
    dens_mid = (dens[:-1, :] + dens[1:, :]) * 0.5
    dep_mid = (dep[:-1, :] + dep[1:, :]) * 0.5

    # clamp_mode == 'softplus'
    dens_mid = _softplus(dens_mid - 1.0)
    alpha = 1.0 - jnp.exp(-(dens_mid * deltas))                  # (S-1, TR)

    # weights[i] = alpha[i] * prod_{j<i} (1 - alpha[j] + 1e-10)
    # exclusive cumsum over the tiny sample axis = strict-lower-tri @ log_t on the
    # (otherwise idle) MXU; precision=HIGHEST keeps log_t in f32 (no bf16 truncation).
    log_t = jnp.log(1.0 - alpha + 1e-10)
    sm1 = log_t.shape[0]
    r_i = jax.lax.broadcasted_iota(jnp.int32, (sm1, sm1), 0)
    c_i = jax.lax.broadcasted_iota(jnp.int32, (sm1, sm1), 1)
    tri = (c_i < r_i).astype(jnp.float32)
    T = jnp.exp(jnp.dot(tri, log_t, preferred_element_type=jnp.float32,
                        precision=jax.lax.Precision.HIGHEST))
    weights = alpha * T                                          # (S-1, TR)
    w_ref[0] = weights

    w_total = jnp.sum(weights, axis=0, keepdims=True)            # (1, TR)
    inv_w = pl.reciprocal(w_total, approx=True)
    comp_depth = jnp.sum(weights * dep_mid, axis=0, keepdims=True) * inv_w
    # nan_to_num(..., inf); the global depth clamp is applied in the wrapper
    comp_depth = jnp.where(jnp.isnan(comp_depth), jnp.float32(jnp.inf), comp_depth)
    depth_ref[0] = comp_depth

    # per-channel compositing keeps the live vreg footprint small at large TR
    n_ch = colors_ref.shape[1]
    for c in range(n_ch):
        ch = colors_ref[0, c]                                    # (S, TR)
        ch_mid = (ch[:-1, :] + ch[1:, :]) * 0.5
        comp_c = jnp.sum(weights * ch_mid, axis=0, keepdims=True)  # (1, TR)
        if white_back:
            comp_c = comp_c + 1.0 - w_total
        rgb_ref[0, c:c + 1] = comp_c * 2.0 - 1.0


def mip_ray_marcher(colors, dd, opts):
    """colors: (B, Cc, S, Rm) sample-major; dd: (B, 2, S, Rm) = [densities, depths].
    Returns rgb (B, Cc, Rm), depth (B, 1, Rm) (unclamped), weights (B, S-1, Rm)."""
    assert opts["clamp_mode"] == "softplus"
    B, Cc, S, Rm = colors.shape
    TR = _pick_tile(Rm, 2048)

    kernel = functools.partial(_ray_march_kernel,
                               white_back=bool(opts.get("white_back", False)))
    rgb, depth, w = pl.pallas_call(
        kernel,
        out_shape=(
            jax.ShapeDtypeStruct((B, Cc, Rm), jnp.float32),
            jax.ShapeDtypeStruct((B, 1, Rm), jnp.float32),
            jax.ShapeDtypeStruct((B, S - 1, Rm), jnp.float32),
        ),
        grid=(B, Rm // TR),
        in_specs=[
            pl.BlockSpec((1, Cc, S, TR), lambda b, i: (b, 0, 0, i)),
            pl.BlockSpec((1, 2, S, TR), lambda b, i: (b, 0, 0, i)),
        ],
        out_specs=(
            pl.BlockSpec((1, Cc, TR), lambda b, i: (b, 0, i)),
            pl.BlockSpec((1, 1, TR), lambda b, i: (b, 0, i)),
            pl.BlockSpec((1, S - 1, TR), lambda b, i: (b, 0, i)),
        ),
        compiler_params=pltpu.CompilerParams(
            dimension_semantics=("parallel", "parallel")),
    )(colors.astype(jnp.float32), dd.astype(jnp.float32))
    return rgb, depth, w


# ----------------------------------------------------------------------------
# plain-JAX glue: tri-grid / ball sampling, grid_sample, importance sampling
# ----------------------------------------------------------------------------
def generate_planes():
    return jnp.asarray([[[1, 0, 0], [0, 1, 0], [0, 0, 1]],
                        [[1, 0, 0], [0, 0, 1], [0, 1, 0]],
                        [[0, 1, 0], [0, 0, 1], [1, 0, 0]]], dtype=jnp.float32)


def roty_np(beta):
    return np.array([[np.cos(beta), 0, np.sin(beta)],
                     [0, 1, 0],
                     [-np.sin(beta), 0, np.cos(beta)]])


def rotz_np(gamma):
    return np.array([[np.cos(gamma), -np.sin(gamma), 0],
                     [np.sin(gamma), np.cos(gamma), 0],
                     [0, 0, 1]])


def cartesian_to_spherical(coords):
    radius = jnp.sqrt((coords ** 2).sum(axis=-1))
    radius = radius / math.sqrt(3)
    radius = 2.0 * radius - 1.0
    theta = jnp.arctan2(jnp.sqrt((coords[:, :, :2] ** 2).sum(axis=-1)), coords[:, :, 2])
    theta = theta / math.pi
    theta = 2.0 * theta - 1.0
    phi = jnp.arctan2(coords[:, :, 1], coords[:, :, 0])
    phi = phi / math.pi
    return theta, phi, radius


def spherical_weights(theta, phi):
    tw = (1.0 + jnp.cos(jnp.pi * theta)) / 2.0
    pw = (1.0 + jnp.cos(jnp.pi * phi)) / 2.0
    return tw * pw


def project_onto_planes(planes, coordinates):
    N, M, _ = coordinates.shape
    n_planes = planes.shape[0]
    coords = jnp.broadcast_to(coordinates[:, None], (N, n_planes, M, 3)).reshape(N * n_planes, M, 3)
    inv_planes = jnp.linalg.inv(planes)
    inv = jnp.broadcast_to(inv_planes[None], (N, n_planes, 3, 3)).reshape(N * n_planes, 3, 3)
    proj = jnp.einsum("bmc,bcd->bmd", coords, inv)
    return proj[..., :2]


def grid_sample_bilinear_zeros_cm(feat, coords_xy):
    # TODO(synk): data-dependent bilinear gather kept in plain JAX (no clean Pallas
    # gather equivalent short of a scalar-prefetch DMA-gather kernel).
    # feat: (BP, C, H, W); coords_xy: (BP, M, 2), (x=width, y=height), align_corners=False.
    # returns (BP, C, M) -- channel-major so no post-gather transpose is needed.
    BP, C, H, W = feat.shape
    x = (coords_xy[..., 0] + 1.0) * W / 2.0 - 0.5
    y = (coords_xy[..., 1] + 1.0) * H / 2.0 - 0.5
    x0 = jnp.floor(x)
    x1 = x0 + 1.0
    y0 = jnp.floor(y)
    y1 = y0 + 1.0
    wx1 = x - x0
    wx0 = 1.0 - wx1
    wy1 = y - y0
    wy0 = 1.0 - wy1
    flat = feat.reshape(BP, C, H * W)
    M = coords_xy.shape[1]

    def gather(ix, iy, wt):
        valid = ((ix >= 0) & (ix <= W - 1) & (iy >= 0) & (iy <= H - 1)).astype(feat.dtype)
        ixc = jnp.clip(ix, 0, W - 1).astype(jnp.int32)
        iyc = jnp.clip(iy, 0, H - 1).astype(jnp.int32)
        idx = jnp.broadcast_to((iyc * W + ixc)[:, None, :], (BP, C, M))
        g = jnp.take_along_axis(flat, idx, axis=2)                # (BP, C, M)
        return g * (valid * wt)[:, None, :]

    return (gather(x0, y0, wx0 * wy0) + gather(x1, y0, wx1 * wy0)
            + gather(x0, y1, wx0 * wy1) + gather(x1, y1, wx1 * wy1))


def sample_from_balls(plane_features, coordinates, plane_axes):
    # plane_features: (N, P, C, H, W); coordinates: (N, M, 3)
    # returns features (N, P, C, M) and weights (N, P, 1, M)  (channel-major)
    N, P, C, H, W = plane_features.shape
    M = coordinates.shape[1]
    pf = plane_features.reshape(N * P, C, H, W)
    theta, phi, radius = cartesian_to_spherical(coordinates)
    w = spherical_weights(theta, phi)                              # (N, M)
    proj_coords = jnp.stack([theta, phi, radius], axis=-1)         # (N, M, 3)
    proj = project_onto_planes(plane_axes, proj_coords)            # (N*P, M, 2)
    out = grid_sample_bilinear_zeros_cm(pf, proj)                  # (N*P, C, M)
    out = out.reshape(N, P, C, M)
    w = jnp.broadcast_to(w[:, None, None, :], (N, P, 1, M))
    return out, w


def sample_from_planes(plane_features, coordinates, plane_axes, box_warp):
    # plane_features: (N, 2, D, C, H, W); coordinates: (N, M, 3)
    N, two, D, C, H, W = plane_features.shape
    assert two == 2 and D == plane_axes.shape[0]
    pf_A = plane_features[:, 0]
    pf_B = plane_features[:, 1]
    rmat_A = jnp.asarray(roty_np(np.pi / 2.0).T.astype(np.float32))
    rmat_B = jnp.asarray((roty_np(-np.pi / 2) @ rotz_np(-np.pi / 2.0)).T.astype(np.float32))
    coordinates = 2.0 / box_warp * coordinates
    coords_A = coordinates @ rmat_A
    coords_B = coordinates @ rmat_B
    out_A, w_A = sample_from_balls(pf_A, coords_A, plane_axes)
    out_B, w_B = sample_from_balls(pf_B, coords_B, plane_axes)
    fused = (out_A * w_A + out_B * w_B) / (w_A + w_B + 1e-08)
    return fused                                                   # (N, 3, C, M)


def triplane_crop_mask(xyz, thresh, boxwarp, allow_bottom=True):
    # xyz: (B, M, 3); returns boolean (B, M, 1)
    xyz = xyz * jnp.asarray([-1.0, 1.0, -1.0])[None, None, :]
    lim = boxwarp / 2 - thresh
    xz_ok = (jnp.abs(xyz[:, :, 0:1]) <= lim) & (jnp.abs(xyz[:, :, 2:3]) <= lim)
    ans = xz_ok
    if allow_bottom:
        ans = ans | ((xyz[:, :, 1:2] <= -lim) & xz_ok)
    return ~ans


def cull_clouds_mask(densities, thresh):
    d = _softplus(densities - 1.0)
    alpha = 1.0 - jnp.exp(-d)
    return alpha < thresh


def sample_stratified(ray_start, ray_end, B, Rm, S, key):
    # sample-major (B, S, Rm); numeric ray_start/ray_end path only.
    # TODO(synk): 'auto' ray limits (get_ray_limits_box) and disparity_space_sampling
    # branches are not implemented.
    base = jnp.linspace(float(ray_start), float(ray_end), S, dtype=jnp.float32).reshape(1, S, 1)
    delta = (float(ray_end) - float(ray_start)) / (S - 1)
    noise = jax.random.uniform(key, (B, S, Rm), jnp.float32)
    return base + noise * delta


def sample_pdf(bins, weights, N_importance, key, eps=1e-5):
    N_rays, N_samples_ = weights.shape
    weights = weights + eps
    pdf = weights / jnp.sum(weights, axis=-1, keepdims=True)
    cdf = jnp.cumsum(pdf, axis=-1)
    cdf = jnp.concatenate([jnp.zeros_like(cdf[:, :1]), cdf], axis=-1)
    u = jax.random.uniform(key, (N_rays, N_importance), jnp.float32)
    inds = jax.vmap(lambda c, uu: jnp.searchsorted(c, uu, side="right"))(cdf, u)
    below = jnp.clip(inds - 1, 0, None)
    above = jnp.clip(inds, None, N_samples_)
    inds_sampled = jnp.stack([below, above], axis=-1).reshape(N_rays, 2 * N_importance)
    cdf_g = jnp.take_along_axis(cdf, inds_sampled, axis=1).reshape(N_rays, N_importance, 2)
    bins_g = jnp.take_along_axis(bins, inds_sampled, axis=1).reshape(N_rays, N_importance, 2)
    denom = cdf_g[..., 1] - cdf_g[..., 0]
    denom = jnp.where(denom < eps, 1.0, denom)
    return bins_g[..., 0] + (u - cdf_g[..., 0]) / denom * (bins_g[..., 1] - bins_g[..., 0])


def sample_importance(z_vals_sm, weights_sm, N_importance, key):
    # z_vals_sm: (B, S, Rm), weights_sm: (B, S-1, Rm) sample-major (small per-ray tensors;
    # the transposes here are cheap relative to the color tensors, which stay put).
    B, S, Rm = z_vals_sm.shape
    z = jnp.transpose(z_vals_sm, (0, 2, 1)).reshape(B * Rm, S)
    w = jnp.transpose(weights_sm, (0, 2, 1)).reshape(B * Rm, S - 1)
    # max_pool1d(k=2, s=1, pad=1) then avg_pool1d(k=2, s=1); implicit zero padding
    w_pad = jnp.pad(w, ((0, 0), (1, 1)))
    w_max = jnp.maximum(w_pad[:, :-1], w_pad[:, 1:])               # (BRm, S)
    w_avg = (w_max[:, :-1] + w_max[:, 1:]) / 2.0                   # (BRm, S-1)
    w_avg = w_avg + 0.01
    z_mid = 0.5 * (z[:, :-1] + z[:, 1:])                           # (BRm, S-1)
    samples = sample_pdf(z_mid, w_avg[:, 1:-1], N_importance, key)  # (BRm, N_imp)
    return jnp.transpose(samples.reshape(B, Rm, N_importance), (0, 2, 1))  # (B, N_imp, Rm)


# ----------------------------------------------------------------------------
# decoder (OSGDecoder-style; the PyTorch module receives `decoder` as an argument)
# ----------------------------------------------------------------------------
def run_model(planes, dec_params, coords_flat, plane_axes, opts):
    """coords_flat: (B, M, 3) sample coordinates.  Returns (B, 8, M) f32:
    row 0 raw sigma, rows 1..3 sigmoid-scaled rgb (density_noise == 0 path)."""
    sf = sample_from_planes(planes, coords_flat, plane_axes, box_warp=opts["box_warp"])
    feat = jnp.mean(sf, axis=1)                                    # (B, C, M), f32 mean over planes
    W1, b1, W2, b2 = dec_params
    return decoder_mlp_pallas(feat, W1, b1, W2, b2)


# ----------------------------------------------------------------------------
# ImportanceRenderer.forward
# ----------------------------------------------------------------------------
def importance_renderer_forward(planes, dec_params, ray_origins, ray_directions, opts,
                                key_strat, key_imp, triplane_crop=0.1,
                                cull_clouds=None, binarize_clouds=None):
    plane_axes = generate_planes()
    B, R, _ = ray_origins.shape
    S = opts["depth_resolution"]
    N_imp = opts["depth_resolution_importance"]
    bw = opts["box_warp"]

    # pad rays once to a lane-friendly multiple of 128; all big per-sample tensors keep
    # the padded ray count Rm on the minor (lane) axis end-to-end (no HBM transposes).
    Rm = ((max(R, 128) + 127) // 128) * 128
    ro = jnp.pad(ray_origins.astype(jnp.float32), ((0, 0), (0, Rm - R), (0, 0)))
    rd = jnp.pad(ray_directions.astype(jnp.float32), ((0, 0), (0, Rm - R), (0, 0)))
    ro_cm = jnp.transpose(ro, (0, 2, 1))                            # (B, 3, Rm), tiny
    rd_cm = jnp.transpose(rd, (0, 2, 1))

    # ---- coarse pass -------------------------------------------------------
    depths_coarse = sample_stratified(opts["ray_start"], opts["ray_end"], B, Rm, S, key_strat)

    coords_c = ro[:, None, :, :] + depths_coarse[..., None] * rd[:, None, :, :]  # (B, S, Rm, 3)
    out_c = run_model(planes, dec_params, coords_c.reshape(B, S * Rm, 3), plane_axes, opts)
    out_c = out_c.reshape(B, 8, S, Rm)
    sigma_c = out_c[:, 0]                                            # (B, S, Rm)
    rgb_c = out_c[:, 1:4]                                            # (B, 3, S, Rm)

    if triplane_crop:
        cm = triplane_crop_mask(coords_c.reshape(B, S * Rm, 3), triplane_crop, bw)
        sigma_c = jnp.where(cm.reshape(B, S, Rm), -1000.0, sigma_c)
    if binarize_clouds:
        ccm = cull_clouds_mask(sigma_c, binarize_clouds)
        sigma_c = jnp.where(ccm, -1000.0, 1000.0)
    elif cull_clouds:
        ccm = cull_clouds_mask(sigma_c, cull_clouds)
        sigma_c = jnp.where(ccm, -1000.0, sigma_c)

    dd_c = jnp.stack([sigma_c, depths_coarse], axis=1)               # (B, 2, S, Rm)
    _, _, weights_c = mip_ray_marcher(rgb_c, dd_c, opts)             # (B, S-1, Rm)

    # ---- importance (fine) pass -------------------------------------------
    depths_fine = sample_importance(depths_coarse, weights_c, N_imp, key_imp)  # (B, N_imp, Rm)

    coords_f = ro[:, None, :, :] + depths_fine[..., None] * rd[:, None, :, :]
    out_f = run_model(planes, dec_params, coords_f.reshape(B, N_imp * Rm, 3), plane_axes, opts)
    out_f = out_f.reshape(B, 8, N_imp, Rm)
    sigma_f = out_f[:, 0]
    rgb_f = out_f[:, 1:4]

    if triplane_crop:
        cmf = triplane_crop_mask(coords_f.reshape(B, N_imp * Rm, 3), triplane_crop, bw)
        sigma_f = jnp.where(cmf.reshape(B, N_imp, Rm), -1000.0, sigma_f)
    if binarize_clouds:
        ccm = cull_clouds_mask(sigma_f, binarize_clouds)
        sigma_f = jnp.where(ccm, -1000.0, 1000.0)
    elif cull_clouds:
        ccm = cull_clouds_mask(sigma_f, cull_clouds)
        sigma_f = jnp.where(ccm, -1000.0, sigma_f)

    # ---- unify (sort along samples; rays stay on the minor axis) ----------
    # TODO(synk): both depth lists are already sorted; a 2-way merge would beat argsort.
    all_depths = jnp.concatenate([depths_coarse, depths_fine], axis=1)       # (B, St, Rm)
    all_densities = jnp.concatenate([sigma_c, sigma_f], axis=1)
    all_colors = jnp.concatenate([rgb_c, rgb_f], axis=2)                     # (B, 3, St, Rm)
    xyz_c = ro_cm[:, :, None, :] + depths_coarse[:, None] * rd_cm[:, :, None, :]
    xyz_f = ro_cm[:, :, None, :] + depths_fine[:, None] * rd_cm[:, :, None, :]
    all_xyz = jnp.concatenate([xyz_c, xyz_f], axis=2)                        # (B, 3, St, Rm)

    idx = jnp.argsort(all_depths, axis=1)
    all_depths = jnp.take_along_axis(all_depths, idx, axis=1)
    all_densities = jnp.take_along_axis(all_densities, idx, axis=1)
    idx_b = idx[:, None]
    all_colors = jnp.take_along_axis(all_colors, jnp.broadcast_to(idx_b, all_colors.shape), axis=2)
    all_xyz = jnp.take_along_axis(all_xyz, jnp.broadcast_to(idx_b, all_xyz.shape), axis=2)

    # ---- final compositing -------------------------------------------------
    colors_all = jnp.concatenate([all_colors, all_xyz], axis=1)              # (B, 6, St, Rm)
    dd_all = jnp.stack([all_densities, all_depths], axis=1)                  # (B, 2, St, Rm)
    rgb_all, depth_all, weights_all = mip_ray_marcher(colors_all, dd_all, opts)

    # global depth clamp (torch.min/max over the real depths tensor)
    real_depths = all_depths[..., :R]
    depth_all = jnp.clip(depth_all, jnp.min(real_depths), jnp.max(real_depths))

    rgb_final = jnp.transpose(rgb_all[:, :3, :R], (0, 2, 1))                 # (B, R, 3)
    depth_final = jnp.transpose(depth_all[:, :, :R], (0, 2, 1))              # (B, R, 1)
    weight_sum = jnp.sum(weights_all, axis=1)[:, :R, None]                   # (B, R, 1)
    return rgb_final, depth_final, weight_sum


# ----------------------------------------------------------------------------
if __name__ == "__main__":
    key = jax.random.PRNGKey(0)
    keys = jax.random.split(key, 8)

    N, C, H, W = 2, 8, 16, 16          # batch, feature channels, plane spatial
    D = 3                              # triplane_depth (must match the 3 plane axes)
    num_rays = 16
    hidden = 32

    planes = jax.random.normal(keys[0], (N, 2, D, C, H, W), jnp.float32) * 0.1
    ray_origins = jax.random.normal(keys[1], (N, num_rays, 3), jnp.float32) * 0.1
    dirs = jax.random.normal(keys[2], (N, num_rays, 3), jnp.float32)
    ray_directions = dirs / jnp.linalg.norm(dirs, axis=-1, keepdims=True)

    # deterministic decoder parameters (OSGDecoder-style MLP: C -> hidden -> 1+3)
    W1 = jax.random.normal(keys[3], (C, hidden), jnp.float32) * 0.3
    b1 = jnp.zeros((hidden,), jnp.float32)
    W2 = jax.random.normal(keys[4], (hidden, 4), jnp.float32) * 0.3
    b2 = jnp.zeros((4,), jnp.float32)

    rendering_options = dict(
        ray_start=0.3, ray_end=1.2,
        depth_resolution=12, depth_resolution_importance=12,
        disparity_space_sampling=False,
        box_warp=2.0, clamp_mode="softplus", white_back=False,
        density_noise=0, triplane_depth=D,
    )

    rgb_final, depth_final, weight_sum = importance_renderer_forward(
        planes, (W1, b1, W2, b2), ray_origins, ray_directions, rendering_options,
        key_strat=keys[5], key_imp=keys[6], triplane_crop=0.1)

    jax.block_until_ready((rgb_final, depth_final, weight_sum))
    assert rgb_final.shape == (N, num_rays, 3)
    assert depth_final.shape == (N, num_rays, 1)
    assert weight_sum.shape == (N, num_rays, 1)
    assert bool(jnp.all(jnp.isfinite(rgb_final)))
    print("KERNEL_OK")
</pallas_src>

<mosaic_0001>
module attributes {stable_mosaic.version = 11 : i64} {
  func.func @_decoder_mlp_kernel(%arg0: i32, %arg1: i32, %arg2: memref<1x8x512xbf16, #tpu.memory_space<vmem>>, %arg3: memref<32x8xbf16, #tpu.memory_space<vmem>>, %arg4: memref<32x1xf32, #tpu.memory_space<vmem>>, %arg5: memref<8x32xbf16, #tpu.memory_space<vmem>>, %arg6: memref<8x1xf32, #tpu.memory_space<vmem>>, %arg7: memref<1x8x512xf32, #tpu.memory_space<vmem>>) attributes {dimension_semantics = [#tpu.dimension_semantics<parallel>, #tpu.dimension_semantics<parallel>], iteration_bounds = array<i64: 2, 3>, scalar_prefetch = 0 : i64, scratch_operands = 0 : i64, tpu.core_type = #tpu.core_type<tc>, window_params = [{transform_indices = @transform_0, window_bounds = array<i64: 1, 8, 512>}, {pipeline_mode = #tpu.pipeline_mode<synchronous>, transform_indices = @transform_1, window_bounds = array<i64: 32, 8>}, {pipeline_mode = #tpu.pipeline_mode<synchronous>, transform_indices = @transform_2, window_bounds = array<i64: 32, 1>}, {pipeline_mode = #tpu.pipeline_mode<synchronous>, transform_indices = @transform_3, window_bounds = array<i64: 8, 32>}, {pipeline_mode = #tpu.pipeline_mode<synchronous>, transform_indices = @transform_4, window_bounds = array<i64: 8, 1>}, {transform_indices = @transform_5, window_bounds = array<i64: 1, 8, 512>}]} {
    %c0 = arith.constant 0 : index
    %c0_0 = arith.constant 0 : index
    %c0_1 = arith.constant 0 : index
    %0 = vector.load %arg2[%c0, %c0_0, %c0_1] : memref<1x8x512xbf16, #tpu.memory_space<vmem>>, vector<1x8x512xbf16>
    %1 = vector.shape_cast %0 : vector<1x8x512xbf16> to vector<8x512xbf16>
    %c0_2 = arith.constant 0 : index
    %c0_3 = arith.constant 0 : index
    %2 = vector.load %arg3[%c0_2, %c0_3] : memref<32x8xbf16, #tpu.memory_space<vmem>>, vector<32x8xbf16>
    %cst = arith.constant dense<0.000000e+00> : vector<32x512xf32>
    %3 = tpu.matmul %2, %1, %cst {dimension_numbers = #tpu.dot_dimension_numbers<[1], [0], [0], [1], [0, 0, 1, 1], [], []>} : vector<32x8xbf16>, vector<8x512xbf16>, vector<32x512xf32> -> vector<32x512xf32>
    %c0_4 = arith.constant 0 : index
    %c0_5 = arith.constant 0 : index
    %4 = vector.load %arg4[%c0_4, %c0_5] : memref<32x1xf32, #tpu.memory_space<vmem>>, vector<32x1xf32>
    %5 = vector.broadcast %4 : vector<32x1xf32> to vector<32x512xf32>
    %6 = arith.addf %3, %5 : vector<32x512xf32>
    %cst_6 = arith.constant 0.000000e+00 : f32
    %7 = vector.broadcast %cst_6 : f32 to vector<32x512xf32>
    %8 = arith.maximumf %6, %7 : vector<32x512xf32>
    %9 = math.absf %6 : vector<32x512xf32>
    %cst_7 = arith.constant 0.000000e+00 : f32
    %10 = vector.broadcast %cst_7 : f32 to vector<32x512xf32>
    %11 = arith.subf %10, %9 : vector<32x512xf32>
    %12 = math.exp %11 : vector<32x512xf32>
    %cst_8 = arith.constant 1.000000e+00 : f32
    %13 = vector.broadcast %cst_8 : f32 to vector<32x512xf32>
    %14 = arith.addf %13, %12 : vector<32x512xf32>
    %15 = math.log %14 : vector<32x512xf32>
    %16 = arith.addf %8, %15 : vector<32x512xf32>
    %c0_9 = arith.constant 0 : index
    %c0_10 = arith.constant 0 : index
    %17 = vector.load %arg5[%c0_9, %c0_10] : memref<8x32xbf16, #tpu.memory_space<vmem>>, vector<8x32xbf16>
    %18 = arith.truncf %16 : vector<32x512xf32> to vector<32x512xbf16>
    %cst_11 = arith.constant dense<0.000000e+00> : vector<8x512xf32>
    %19 = tpu.matmul %17, %18, %cst_11 {dimension_numbers = #tpu.dot_dimension_numbers<[1], [0], [0], [1], [0, 0, 1, 1], [], []>} : vector<8x32xbf16>, vector<32x512xbf16>, vector<8x512xf32> -> vector<8x512xf32>
    %c0_12 = arith.constant 0 : index
    %c0_13 = arith.constant 0 : index
    %20 = vector.load %arg6[%c0_12, %c0_13] : memref<8x1xf32, #tpu.memory_space<vmem>>, vector<8x1xf32>
    %21 = vector.broadcast %20 : vector<8x1xf32> to vector<8x512xf32>
    %22 = arith.addf %19, %21 : vector<8x512xf32>
    %cst_14 = arith.constant 0.000000e+00 : f32
    %23 = vector.broadcast %cst_14 : f32 to vector<8x512xf32>
    %24 = arith.subf %23, %22 : vector<8x512xf32>
    %25 = math.exp %24 : vector<8x512xf32>
    %cst_15 = arith.constant 1.000000e+00 : f32
    %26 = vector.broadcast %cst_15 : f32 to vector<8x512xf32>
    %27 = arith.addf %26, %25 : vector<8x512xf32>
    %cst_16 = arith.constant 1.000000e+00 : f32
    %28 = vector.broadcast %cst_16 : f32 to vector<8x512xf32>
    %29 = arith.divf %28, %27 : vector<8x512xf32>
    %cst_17 = arith.constant 1.002000e+00 : f32
    %30 = vector.broadcast %cst_17 : f32 to vector<8x512xf32>
    %31 = arith.mulf %29, %30 : vector<8x512xf32>
    %cst_18 = arith.constant 1.000000e-03 : f32
    %32 = vector.broadcast %cst_18 : f32 to vector<8x512xf32>
    %33 = arith.subf %31, %32 : vector<8x512xf32>
    %34 = tpu.iota {dimensions = array<i32: 0>} : vector<8x512xi32>
    %c0_i32 = arith.constant 0 : i32
    %35 = vector.broadcast %c0_i32 : i32 to vector<8x512xi32>
    %36 = arith.cmpi eq, %34, %35 : vector<8x512xi32>
    %37 = arith.select %36, %22, %33 : vector<8x512xi1>, vector<8x512xf32>
    %c0_19 = arith.constant 0 : index
    %c0_20 = arith.constant 0 : index
    %c0_21 = arith.constant 0 : index
    %38 = vector.load %arg7[%c0_19, %c0_20, %c0_21] : memref<1x8x512xf32, #tpu.memory_space<vmem>>, vector<1x8x512xf32>
    %39 = vector.shape_cast %38 : vector<1x8x512xf32> to vector<8x512xf32>
    %40 = vector.shape_cast %37 : vector<8x512xf32> to vector<1x8x512xf32>
    tpu.vector_store %arg7[%c0_19, %c0_20, %c0_21], %40 {strides = array<i32>} : memref<1x8x512xf32, #tpu.memory_space<vmem>>, vector<1x8x512xf32>,
    return
  }
  func.func @transform_0(%arg0: i32, %arg1: i32) -> (i32, i32, i32) {
    %c0_i32 = arith.constant 0 : i32
    %c0_i32_0 = arith.constant 0 : i32
    return %arg0, %c0_i32, %arg1 : i32, i32, i32
  }
  func.func @transform_1(%arg0: i32, %arg1: i32) -> (i32, i32) {
    %c0_i32 = arith.constant 0 : i32
    %c0_i32_0 = arith.constant 0 : i32
    %c0_i32_1 = arith.constant 0 : i32
    return %c0_i32, %c0_i32_0 : i32, i32
  }
  func.func @transform_2(%arg0: i32, %arg1: i32) -> (i32, i32) {
    %c0_i32 = arith.constant 0 : i32
    %c0_i32_0 = arith.constant 0 : i32
    %c0_i32_1 = arith.constant 0 : i32
    return %c0_i32, %c0_i32_0 : i32, i32
  }
  func.func @transform_3(%arg0: i32, %arg1: i32) -> (i32, i32) {
    %c0_i32 = arith.constant 0 : i32
    %c0_i32_0 = arith.constant 0 : i32
    %c0_i32_1 = arith.constant 0 : i32
    return %c0_i32, %c0_i32_0 : i32, i32
  }
  func.func @transform_4(%arg0: i32, %arg1: i32) -> (i32, i32) {
    %c0_i32 = arith.constant 0 : i32
    %c0_i32_0 = arith.constant 0 : i32
    %c0_i32_1 = arith.constant 0 : i32
    return %c0_i32, %c0_i32_0 : i32, i32
  }
  func.func @transform_5(%arg0: i32, %arg1: i32) -> (i32, i32, i32) {
    %c0_i32 = arith.constant 0 : i32
    %c0_i32_0 = arith.constant 0 : i32
    return %arg0, %c0_i32, %arg1 : i32, i32, i32
  }
}

</mosaic_0001>

<llo_original>
// kernel: tpu_custom_call.1
$region0: #{tpu_custom_call.1}
  #allocation0 [shape = 'u32[]', space=smem, size = 0x4, offset = 0x4, fixed_abs, tag = 'smem constant byte address 0x4 - core index']
  #allocation1 [shape = 'u32[144,128]{1,0:T(1,128)}', space=vmem, size = 0x12000, scoped, tag = 'internal scratch']
  %s0 = inlined_call_operand.hbm [shape: bf16[2,8,1536], index: 0, kind: input, shape index: {}]
  %s1 = inlined_call_operand.vmem [shape: bf16[32,8], index: 1, kind: input, shape index: {}]
  %s2 = inlined_call_operand.vmem [shape: f32[32,1], index: 2, kind: input, shape index: {}]
  %s3 = inlined_call_operand.vmem [shape: bf16[8,32], index: 3, kind: input, shape index: {}]
  %s4 = inlined_call_operand.vmem [shape: f32[8,1], index: 4, kind: input, shape index: {}]
  %s5 = inlined_call_operand.hbm [shape: f32[2,8,1536], index: 5, kind: output, shape index: {}]
  %s6 = sld [smem:[#allocation0]]
  $region57: #{tpu_custom_call.1} parent=0
    _
  %s8 = ssub.s32 1, %s6
  %s9 = scalar_select 0, %s8, %s6
  $region1: #{tpu_custom_call.1} parent=0
    #allocation2 [shape = 'u8[16384]{0}', space=vmem, size = 0x4000, scoped, tag = 'input window, operand 0']
    #allocation3 [shape = 's32[2]{0}', space=sflag, size = 0x8, scoped, tag = 'scoped memory for tpu_custom_call.1']
    #allocation4 [shape = 's32[2]{0}', space=sflag, size = 0x8, scoped, tag = 'scoped memory for tpu_custom_call.1']
    #allocation5 [shape = 'u8[32768]{0}', space=vmem, size = 0x8000, scoped, tag = 'output window, operand 0']
    %10 = vsyncpa [#allocation3], 0
    %s11 = scalar_lea.sflag [#allocation3], 1
    %12 = vsyncpa %s11, 0
    %13 = vsyncpa [#allocation4], 0
    %s14 = scalar_lea.sflag [#allocation4], 1
    %15 = vsyncpa %s14, 0
    loop: start=0, step=1, limit=8
    $region2: #{tpu_custom_call.1} parent=1 // loop_pre_header
      _
    $region3: #{tpu_custom_call.1} parent=1 // loop_header
      %s17 = sphi 0, %s21
      %p18 = scmp.ge.s32.totalorder %s17, 8
      %s24 = sphi 0, %s36
      %s25 = sphi 0, %s32
      %s26 = sphi 0, %s24
      %s27 = sphi 0, %s25
      %s28 = sphi 0, %s26
      %s29 = sphi 0, %s27
      %s41 = sphi 0, %s43
      %s44 = sphi 0, %s41
      %s45 = sphi 0, %s44
      %s61 = sphi 0, %s45
      %s65 = sphi 0, %s65
      %s67 = sphi 0, %s65
      %s68 = sphi 0, %s67
      %s82 = sphi 0, %s68
      %s86 = sphi 0, %s86
      %s88 = sphi 0, %s86
      %s89 = sphi 0, %s88
      %s103 = sphi 0, %s89
      %s107 = sphi 0, %s107
      %s109 = sphi 0, %s107
      %s110 = sphi 0, %s109
      %s124 = sphi 0, %s110
      %s128 = sphi 0, %s128
      %s130 = sphi 0, %s128
      %s131 = sphi 0, %s130
      %s145 = sphi 0, %s131
      %s153 = sphi 0, %s155
      %s156 = sphi 0, %s153
      %s157 = sphi 0, %s156
      %s173 = sphi 0, %s157
    $region4: #{tpu_custom_call.1} parent=1 // loop_header_branch
      %20 = sbr.rel (%p18) target = $region8
    $region5: #{tpu_custom_call.1} parent=1 // loop_body
      %s22 = ssub.s32 %s17, 1
      %s23 = ssub.s32 %s17, 2
      %s30 = sadd.s32 1, %s25
      %p31 = scmp.ge.s32.totalorder %s30, 3
      %s32 = scalar_select %p31, 0, %s30
      %s33 = sadd.s32 1, %s24
      %s34 = scalar_select %p31, %s33, %s24
      %p35 = scmp.ge.s32.totalorder %s34, 2
      %s36 = scalar_select %p35, 0, %s34
      %s37 = ssub.s32 %s24, %s36
      %s38 = ssub.s32 %s25, %s32
      %s39 = sor.u32 %s37, %s38
      %p40 = scmp.eq.s32.totalorder %s39, 0
      %s42 = sadd.s32 %s41, 1
      %s43 = scalar_select %p40, %s41, %s42
      %p46 = pneg %p40
      %p47 = scmp.eq.s32.totalorder %s17, 5
      %p48 = por %p46, %p47
      %p49 = scmp.ne.s32.totalorder %s41, %s44
      %p50 = scmp.eq.s32.totalorder %s17, 0
      %p51 = por %p49, %p50
      %p52 = scmp.ne.s32.totalorder %s41, %s44
      %p53 = scmp.eq.s32.totalorder %s22, 5
      %p54 = por %p52, %p53
      %p55 = scmp.ne.s32.totalorder %s44, %s45
      %p56 = scmp.eq.s32.totalorder %s22, 0
      %p57 = por %p55, %p56
      %p58 = scmp.ne.s32.totalorder %s44, %s45
      %p59 = scmp.eq.s32.totalorder %s23, 5
      %p60 = por %p58, %p59
      %p62 = scmp.ne.s32.totalorder %s45, %s61
      %p63 = scmp.eq.s32.totalorder %s23, 0
      %p64 = por %p62, %p63
      %s66 = sadd.s32 %s65, 1
      %p69 = scmp.eq.s32.totalorder %s17, 5
      %p70 = scmp.ne.s32.totalorder %s65, %s67
      %p71 = scmp.eq.s32.totalorder %s17, 0
      %p72 = por %p70, %p71
      %p73 = scmp.ne.s32.totalorder %s65, %s67
      %p74 = scmp.eq.s32.totalorder %s22, 5
      %p75 = por %p73, %p74
      %p76 = scmp.ne.s32.totalorder %s67, %s68
      %p77 = scmp.eq.s32.totalorder %s22, 0
      %p78 = por %p76, %p77
      %p79 = scmp.ne.s32.totalorder %s67, %s68
      %p80 = scmp.eq.s32.totalorder %s23, 5
      %p81 = por %p79, %p80
      %p83 = scmp.ne.s32.totalorder %s68, %s82
      %p84 = scmp.eq.s32.totalorder %s23, 0
      %p85 = por %p83, %p84
      %s87 = sadd.s32 %s86, 1
      %p90 = scmp.eq.s32.totalorder %s17, 5
      %p91 = scmp.ne.s32.totalorder %s86, %s88
      %p92 = scmp.eq.s32.totalorder %s17, 0
      %p93 = por %p91, %p92
      %p94 = scmp.ne.s32.totalorder %s86, %s88
      %p95 = scmp.eq.s32.totalorder %s22, 5
      %p96 = por %p94, %p95
      %p97 = scmp.ne.s32.totalorder %s88, %s89
      %p98 = scmp.eq.s32.totalorder %s22, 0
      %p99 = por %p97, %p98
      %p100 = scmp.ne.s32.totalorder %s88, %s89
      %p101 = scmp.eq.s32.totalorder %s23, 5
      %p102 = por %p100, %p101
      %p104 = scmp.ne.s32.totalorder %s89, %s103
      %p105 = scmp.eq.s32.totalorder %s23, 0
      %p106 = por %p104, %p105
      %s108 = sadd.s32 %s107, 1
      %p111 = scmp.eq.s32.totalorder %s17, 5
      %p112 = scmp.ne.s32.totalorder %s107, %s109
      %p113 = scmp.eq.s32.totalorder %s17, 0
      %p114 = por %p112, %p113
      %p115 = scmp.ne.s32.totalorder %s107, %s109
      %p116 = scmp.eq.s32.totalorder %s22, 5
      %p117 = por %p115, %p116
      %p118 = scmp.ne.s32.totalorder %s109, %s110
      %p119 = scmp.eq.s32.totalorder %s22, 0
      %p120 = por %p118, %p119
      %p121 = scmp.ne.s32.totalorder %s109, %s110
      %p122 = scmp.eq.s32.totalorder %s23, 5
      %p123 = por %p121, %p122
      %p125 = scmp.ne.s32.totalorder %s110, %s124
      %p126 = scmp.eq.s32.totalorder %s23, 0
      %p127 = por %p125, %p126
      %s129 = sadd.s32 %s128, 1
      %p132 = scmp.eq.s32.totalorder %s17, 5
      %p133 = scmp.ne.s32.totalorder %s128, %s130
      %p134 = scmp.eq.s32.totalorder %s17, 0
      %p135 = por %p133, %p134
      %p136 = scmp.ne.s32.totalorder %s128, %s130
      %p137 = scmp.eq.s32.totalorder %s22, 5
      %p138 = por %p136, %p137
      %p139 = scmp.ne.s32.totalorder %s130, %s131
      %p140 = scmp.eq.s32.totalorder %s22, 0
      %p141 = por %p139, %p140
      %p142 = scmp.ne.s32.totalorder %s130, %s131
      %p143 = scmp.eq.s32.totalorder %s23, 5
      %p144 = por %p142, %p143
      %p146 = scmp.ne.s32.totalorder %s131, %s145
      %p147 = scmp.eq.s32.totalorder %s23, 0
      %p148 = por %p146, %p147
      %s149 = ssub.s32 %s24, %s36
      %s150 = ssub.s32 %s25, %s32
      %s151 = sor.u32 %s149, %s150
      %p152 = scmp.eq.s32.totalorder %s151, 0
      %s154 = sadd.s32 %s153, 1
      %s155 = scalar_select %p152, %s153, %s154
      %p158 = pneg %p152
      %p159 = scmp.eq.s32.totalorder %s17, 5
      %p160 = por %p158, %p159
      %p161 = scmp.ne.s32.totalorder %s153, %s156
      %p162 = scmp.eq.s32.totalorder %s17, 0
      %p163 = por %p161, %p162
      %p164 = scmp.ne.s32.totalorder %s153, %s156
      %p165 = scmp.eq.s32.totalorder %s22, 5
      %p166 = por %p164, %p165
      %p167 = scmp.ne.s32.totalorder %s156, %s157
      %p168 = scmp.eq.s32.totalorder %s22, 0
      %p169 = por %p167, %p168
      %p170 = scmp.ne.s32.totalorder %s156, %s157
      %p171 = scmp.eq.s32.totalorder %s23, 5
      %p172 = por %p170, %p171
      %p174 = scmp.ne.s32.totalorder %s157, %s173
      %p175 = scmp.eq.s32.totalorder %s23, 0
      %p176 = por %p174, %p175
      %p177 = scmp.le.s32.totalorder 1, %s17
      %p178 = scmp.lt.s32.totalorder %s17, 7
      %p179 = pnand %p177, %p178
      %p180 = pneg %p179
      // Predicated region
      $region9: #{tpu_custom_call.1} parent=5 // pred_check
        _
      $region10: #{tpu_custom_call.1} parent=5 // pred_check_branch
        %182 = sbr.rel (%p179) target = $region12
      $region11: #{tpu_custom_call.1} parent=5 // pred_region
        %s183 = ssub.s32 %s17, 1
        // Predicated region
        $region13: #{tpu_custom_call.1} parent=11 // pred_check
          %p184 = pneg %p78
        $region14: #{tpu_custom_call.1} parent=11 // pred_check_branch
          %186 = sbr.rel (%p184) target = $region16
        $region15: #{tpu_custom_call.1} parent=11 // pred_region
          _
        $region16: #{tpu_custom_call.1} parent=11 // pred_fallthru
          _
        // Predicated region
        $region17: #{tpu_custom_call.1} parent=11 // pred_check
          %p187 = pneg %p99
        $region18: #{tpu_custom_call.1} parent=11 // pred_check_branch
          %189 = sbr.rel (%p187) target = $region20
        $region19: #{tpu_custom_call.1} parent=11 // pred_region
          _
        $region20: #{tpu_custom_call.1} parent=11 // pred_fallthru
          _
        // Predicated region
        $region21: #{tpu_custom_call.1} parent=11 // pred_check
          %p190 = pneg %p120
        $region22: #{tpu_custom_call.1} parent=11 // pred_check_branch
          %192 = sbr.rel (%p190) target = $region24
        $region23: #{tpu_custom_call.1} parent=11 // pred_region
          _
        $region24: #{tpu_custom_call.1} parent=11 // pred_fallthru
          _
        // Predicated region
        $region25: #{tpu_custom_call.1} parent=11 // pred_check
          %p193 = pneg %p141
        $region26: #{tpu_custom_call.1} parent=11 // pred_check_branch
          %195 = sbr.rel (%p193) target = $region28
        $region27: #{tpu_custom_call.1} parent=11 // pred_region
          _
        $region28: #{tpu_custom_call.1} parent=11 // pred_fallthru
          _
      $region12: #{tpu_custom_call.1} parent=5 // pred_fallthru
        _
      %p196 = scmp.lt.s32.totalorder %s17, 6
      // Predicated region
      $region29: #{tpu_custom_call.1} parent=5 // pred_check
        %p197 = pneg %p196
      $region30: #{tpu_custom_call.1} parent=5 // pred_check_branch
        %199 = sbr.rel (%p197) target = $region32
      $region31: #{tpu_custom_call.1} parent=5 // pred_region
        // Predicated region
        $region33: #{tpu_custom_call.1} parent=31 // pred_check
          %p200 = pneg %p51
        $region34: #{tpu_custom_call.1} parent=31 // pred_check_branch
          %202 = sbr.rel (%p200) target = $region36
        $region35: #{tpu_custom_call.1} parent=31 // pred_region
          %s203 = sand.u32 %s41, 1
          %s204 = scalar_lea.sflag [#allocation3], %s203
          %s205 = sand.u32 %s41, 1
          %s206 = smul.addr %s205, 16
          %s207 = scalar_lea.vmem [#allocation2], %s206
          %s208 = smul.u32 4, %s25
          %s210 = ssub.s32 256, 256
          %211 = vsyncadd %s204, %s210
          %s212 = smul.addr %s24, 12
          %s213 = sadd.s32 %s208, %s212
          %s214 = smul.addr %s213, 64
          %s215 = scalar_lea.hbm %s0, %s214
          %s217 = sshll.u32 %s207, 4
          %s218 = int_to_ptr.vmem [resolvable:$true] %s217
          %220 = dma.hbm_to_vmem [thread:$0]  %s215, 256, %s218, %s204
        $region36: #{tpu_custom_call.1} parent=31 // pred_fallthru
          _
      $region32: #{tpu_custom_call.1} parent=5 // pred_fallthru
        _
      %p221 = scmp.le.s32.totalorder 1, %s17
      %p222 = scmp.lt.s32.totalorder %s17, 7
      %p223 = pnand %p221, %p222
      %p224 = pneg %p223
      // Predicated region
      $region37: #{tpu_custom_call.1} parent=5 // pred_check
        _
      $region38: #{tpu_custom_call.1} parent=5 // pred_check_branch
        %226 = sbr.rel (%p223) target = $region40
      $region39: #{tpu_custom_call.1} parent=5 // pred_region
        %s227 = ssub.s32 %s17, 1
        %s228 = sand.u32 %s44, 1
        %s229 = scalar_lea.sflag [#allocation3], %s228
        %s230 = sand.u32 %s44, 1
        %s231 = smul.addr %s230, 16
        %s232 = scalar_lea.vmem [#allocation2], %s231
        // Predicated region
        $region41: #{tpu_custom_call.1} parent=39 // pred_check
          %p233 = pneg %p57
        $region42: #{tpu_custom_call.1} parent=39 // pred_check_branch
          %235 = sbr.rel (%p233) target = $region44
        $region43: #{tpu_custom_call.1} parent=39 // pred_region
          %236 = dma.done %s229, 256
        $region44: #{tpu_custom_call.1} parent=39 // pred_fallthru
          _
        %s237 = sand.u32 %s44, 1
        %s238 = scalar_lea.sflag [#allocation3], %s237
        %s239 = sand.u32 %s44, 1
        %s240 = smul.addr %s239, 16
        %s241 = scalar_lea.vmem [#allocation2], %s240
        %p242 = pneg %p57
        %p243 = pneg %p54
        %p244 = pneg %p78
        %p245 = pneg %p75
        %p246 = pneg %p99
        %p247 = pneg %p96
        %p248 = pneg %p120
        %p249 = pneg %p117
        %p250 = pneg %p141
        %p251 = pneg %p138
        %p252 = pneg %p169
        %p253 = pneg %p166
        %s254 = sand.u32 %s156, 1
        %s255 = scalar_lea.sflag [#allocation4], %s254
        %s256 = sand.u32 %s156, 1
        %s257 = smul.addr %s256, 32
        %s258 = scalar_lea.vmem [#allocation5], %s257
        %s259 = smul.u32 4, %s27
        %s260 = smul.u32 4, %s27
        %v262 = vld [vmem:[%s232] sm:$0xff]
        %v263 = vld [vmem:[%s232 + $0x8] sm:$0xff]
        %v264 = vld [vmem:[%s1] sm:$0xf]
        %v265 = vld [vmem:[%s1 + $0x4] sm:$0xf]
        %v266 = vld [vmem:[%s1 + $0x8] sm:$0xf]
        %v267 = vld [vmem:[%s1 + $0xc] sm:$0xf]
        %v268 = vld [vmem:[%s2] sm:$0xff]
        %v269 = vld [vmem:[%s2 + $0x8] sm:$0xff]
        %v270 = vld [vmem:[%s2 + $0x10] sm:$0xff]
        %v271 = vld [vmem:[%s2 + $0x18] sm:$0xff]
        %273 = vset.pattern.permute.xlu0 0
        %274 = vperm.xlu0 %273, %v268
        %v275 = vpop.permute.xlu0 %274
        %278 = vset.pattern.permute.xlu0 0
        %279 = vperm.xlu0 %278, %v269
        %v280 = vpop.permute.xlu0 %279
        %283 = vset.pattern.permute.xlu0 0
        %284 = vperm.xlu0 %283, %v270
        %v285 = vpop.permute.xlu0 %284
        %288 = vset.pattern.permute.xlu0 0
        %289 = vperm.xlu0 %288, %v271
        %v290 = vpop.permute.xlu0 %289
        %v296 = vunpack.c.l.b16 %v264
        %v297 = vunpack.c.l.b16 %v265
        %v298 = vunpack.c.l.b16 %v266
        %v299 = vunpack.c.l.b16 %v267
        %v300 = vpack.c.b16 %v297, %v296
        %v301 = vpack.c.b16 %v299, %v298
        %v304 = vunpack.c.l.b16 %v262
        %v305 = vunpack.c.h.b16 %v262
        %v306 = vunpack.c.l.b16 %v263
        %v307 = vunpack.c.h.b16 %v263
        %v308 = vpack.c.b16 %v304, %v304
        %v309 = vpack.c.b16 %v305, %v305
        %v310 = vpack.c.b16 %v306, %v306
        %v311 = vpack.c.b16 %v307, %v307
        %vm312 = vcmask 64512
        %v314 = vsel %vm312, %v300, 0
        %v317 = vsel %vm312, %v301, 0
        %vm319 = vcmask 1043456
        %v321 = vsel %vm319, %v308, 0
        %v324 = vsel %vm319, %v309, 0
        %v327 = vsel %vm319, %v310, 0
        %v330 = vsel %vm319, %v311, 0
        %332 = vmatprep.subr.bf16.mxu0 %v324
        %333 = vmatpush1.bf16.msra.mxu0 %v321
        %334 = vmatprep.subr.bf16.mxu0 0
        %335 = vmatpush1.bf16.msra.mxu0 0
        %336 = vmatprep.subr.bf16.mxu0 0
        %337 = vmatpush1.bf16.msra.mxu0 0
        %338 = vmatprep.subr.bf16.mxu0 0
        %339 = vmatpush1.bf16.msra.mxu0 0
        %340 = vmatprep.subr.bf16.mxu0 0
        %341 = vmatpush1.bf16.msra.mxu0 0
        %342 = vmatprep.subr.bf16.mxu0 0
        %343 = vmatpush1.bf16.msra.mxu0 0
        %344 = vmatprep.subr.bf16.mxu0 0
        %345 = vmatpush1.bf16.msra.mxu0 0
        %346 = vmatprep.subr.bf16.mxu0 0
        %347 = vmatpush1.bf16.msra.mxu0 0
        %348 = vmatprep.subr.bf16.mxu0 0
        %349 = vmatpush1.bf16.msra.mxu0 0
        %350 = vmatprep.subr.bf16.mxu0 0
        %351 = vmatpush1.bf16.msra.mxu0 0
        %352 = vmatprep.subr.bf16.mxu0 0
        %353 = vmatpush1.bf16.msra.mxu0 0
        %354 = vmatprep.subr.bf16.mxu0 0
        %355 = vmatpush1.bf16.msra.mxu0 0
        %356 = vmatprep.subr.bf16.mxu0 0
        %357 = vmatpush1.bf16.msra.mxu0 0
        %358 = vmatprep.subr.bf16.mxu0 0
        %359 = vmatpush1.bf16.msra.mxu0 0
        %360 = vmatprep.subr.bf16.mxu0 0
        %361 = vmatpush1.bf16.msra.mxu0 0
        %362 = vmatprep.subr.bf16.mxu0 0
        %363 = vmatpush1.bf16.msra.mxu0 0
        %364 = vmatprep.mubr.bf16.mxu0 0
        %365 = vmatmul.mubr.bf16.gmra.mrb[0].mxu0 %v314
        %v366 = vpop.f32.mrb[0].mxu0
        %v367 = vadd.f32 %v275, %v366
        %v368 = vpop.f32.mrb[0].mxu0
        %v369 = vadd.f32 %v275, %v368
        %v370 = vpop.f32.mrb[0].mxu0
        %v371 = vadd.f32 %v280, %v370
        %v372 = vpop.f32.mrb[0].mxu0
        %v373 = vadd.f32 %v280, %v372
        %374 = vmatprep.mubr.bf16.mxu0 0
        %375 = vmatmul.mubr.bf16.gmra.mrb[0].mxu0 %v317
        %v376 = vpop.f32.mrb[0].mxu0
        %v377 = vadd.f32 %v285, %v376
        %v378 = vpop.f32.mrb[0].mxu0
        %v379 = vadd.f32 %v285, %v378
        %v380 = vpop.f32.mrb[0].mxu0
        %v381 = vadd.f32 %v290, %v380
        %v382 = vpop.f32.mrb[0].mxu0
        %v383 = vadd.f32 %v290, %v382
        %384 = vdwg.mxu0
        %385 = vmatprep.subr.bf16.mxu0 %v330
        %386 = vmatpush1.bf16.msra.mxu0 %v327
        %387 = vmatprep.subr.bf16.mxu0 0
        %388 = vmatpush1.bf16.msra.mxu0 0
        %389 = vmatprep.subr.bf16.mxu0 0
        %390 = vmatpush1.bf16.msra.mxu0 0
        %391 = vmatprep.subr.bf16.mxu0 0
        %392 = vmatpush1.bf16.msra.mxu0 0
        %393 = vmatprep.subr.bf16.mxu0 0
        %394 = vmatpush1.bf16.msra.mxu0 0
        %395 = vmatprep.subr.bf16.mxu0 0
        %396 = vmatpush1.bf16.msra.mxu0 0
        %397 = vmatprep.subr.bf16.mxu0 0
        %398 = vmatpush1.bf16.msra.mxu0 0
        %399 = vmatprep.subr.bf16.mxu0 0
        %400 = vmatpush1.bf16.msra.mxu0 0
        %401 = vmatprep.subr.bf16.mxu0 0
        %402 = vmatpush1.bf16.msra.mxu0 0
        %403 = vmatprep.subr.bf16.mxu0 0
        %404 = vmatpush1.bf16.msra.mxu0 0
        %405 = vmatprep.subr.bf16.mxu0 0
        %406 = vmatpush1.bf16.msra.mxu0 0
        %407 = vmatprep.subr.bf16.mxu0 0
        %408 = vmatpush1.bf16.msra.mxu0 0
        %409 = vmatprep.subr.bf16.mxu0 0
        %410 = vmatpush1.bf16.msra.mxu0 0
        %411 = vmatprep.subr.bf16.mxu0 0
        %412 = vmatpush1.bf16.msra.mxu0 0
        %413 = vmatprep.subr.bf16.mxu0 0
        %414 = vmatpush1.bf16.msra.mxu0 0
        %415 = vmatprep.subr.bf16.mxu0 0
        %416 = vmatpush1.bf16.msra.mxu0 0
        %417 = vmatprep.mubr.bf16.mxu0 0
        %418 = vmatmul.mubr.bf16.gmra.mrb[0].mxu0 %v314
        %v419 = vpop.f32.mrb[0].mxu0
        %v420 = vadd.f32 %v275, %v419
        %v421 = vpop.f32.mrb[0].mxu0
        %v422 = vadd.f32 %v275, %v421
        %v423 = vpop.f32.mrb[0].mxu0
        %v424 = vadd.f32 %v280, %v423
        %v425 = vpop.f32.mrb[0].mxu0
        %v426 = vadd.f32 %v280, %v425
        %427 = vmatprep.mubr.bf16.mxu0 0
        %428 = vmatmul.mubr.bf16.gmra.mrb[0].mxu0 %v317
        %v429 = vpop.f32.mrb[0].mxu0
        %v430 = vadd.f32 %v285, %v429
        %v431 = vpop.f32.mrb[0].mxu0
        %v432 = vadd.f32 %v285, %v431
        %v433 = vpop.f32.mrb[0].mxu0
        %v434 = vadd.f32 %v290, %v433
        %v435 = vpop.f32.mrb[0].mxu0
        %v436 = vadd.f32 %v290, %v435
        %437 = vdwg.mxu0
        %v438 = vmax.f32 %v367, 0.0
        %v439 = vmax.f32 %v369, 0.0
        %v440 = vmax.f32 %v420, 0.0
        %v441 = vmax.f32 %v422, 0.0
        %v442 = vmax.f32 %v371, 0.0
        %v443 = vmax.f32 %v373, 0.0
        %v444 = vmax.f32 %v424, 0.0
        %v445 = vmax.f32 %v426, 0.0
        %v446 = vmax.f32 %v377, 0.0
        %v447 = vmax.f32 %v379, 0.0
        %v448 = vmax.f32 %v430, 0.0
        %v449 = vmax.f32 %v432, 0.0
        %v450 = vmax.f32 %v381, 0.0
        %v451 = vmax.f32 %v383, 0.0
        %v452 = vmax.f32 %v434, 0.0
        %v453 = vmax.f32 %v436, 0.0
        %v454 = vand.u32 2147483647, %v367
        %v455 = vand.u32 2147483647, %v369
        %v456 = vand.u32 2147483647, %v420
        %v457 = vand.u32 2147483647, %v422
        %v458 = vand.u32 2147483647, %v371
        %v459 = vand.u32 2147483647, %v373
        %v460 = vand.u32 2147483647, %v424
        %v461 = vand.u32 2147483647, %v426
        %v462 = vand.u32 2147483647, %v377
        %v463 = vand.u32 2147483647, %v379
        %v464 = vand.u32 2147483647, %v430
        %v465 = vand.u32 2147483647, %v432
        %v466 = vand.u32 2147483647, %v381
        %v467 = vand.u32 2147483647, %v383
        %v468 = vand.u32 2147483647, %v434
        %v469 = vand.u32 2147483647, %v436
        %v470 = vsub.f32 0.0, %v454
        %v471 = vsub.f32 0.0, %v455
        %v472 = vsub.f32 0.0, %v456
        %v473 = vsub.f32 0.0, %v457
        %v474 = vsub.f32 0.0, %v458
        %v475 = vsub.f32 0.0, %v459
        %v476 = vsub.f32 0.0, %v460
        %v477 = vsub.f32 0.0, %v461
        %v478 = vsub.f32 0.0, %v462
        %v479 = vsub.f32 0.0, %v463
        %v480 = vsub.f32 0.0, %v464
        %v481 = vsub.f32 0.0, %v465
        %v482 = vsub.f32 0.0, %v466
        %v483 = vsub.f32 0.0, %v467
        %v484 = vsub.f32 0.0, %v468
        %v485 = vsub.f32 0.0, %v469
        %v486 = vmul.f32 %v470, 1.442695
        %v487 = vpow.pop %v486
        %v488 = vmul.f32 %v471, 1.442695
        %v489 = vpow.pop %v488
        %v490 = vmul.f32 %v472, 1.442695
        %v491 = vpow.pop %v490
        %v492 = vmul.f32 %v473, 1.442695
        %v493 = vpow.pop %v492
        %v494 = vmul.f32 %v474, 1.442695
        %v495 = vpow.pop %v494
        %v496 = vmul.f32 %v475, 1.442695
        %v497 = vpow.pop %v496
        %v498 = vmul.f32 %v476, 1.442695
        %v499 = vpow.pop %v498
        %v500 = vmul.f32 %v477, 1.442695
        %v501 = vpow.pop %v500
        %v502 = vmul.f32 %v478, 1.442695
        %v503 = vpow.pop %v502
        %v504 = vmul.f32 %v479, 1.442695
        %v505 = vpow.pop %v504
        %v506 = vmul.f32 %v480, 1.442695
        %v507 = vpow.pop %v506
        %v508 = vmul.f32 %v481, 1.442695
        %v509 = vpow.pop %v508
        %v510 = vmul.f32 %v482, 1.442695
        %v511 = vpow.pop %v510
        %v512 = vmul.f32 %v483, 1.442695
        %v513 = vpow.pop %v512
        %v514 = vmul.f32 %v484, 1.442695
        %v515 = vpow.pop %v514
        %v516 = vmul.f32 %v485, 1.442695
        %v517 = vpow.pop %v516
        %v518 = vadd.f32 %v487, 1.0
        %v519 = vadd.f32 %v489, 1.0
        %v520 = vadd.f32 %v491, 1.0
        %v521 = vadd.f32 %v493, 1.0
        %v522 = vadd.f32 %v495, 1.0
        %v523 = vadd.f32 %v497, 1.0
        %v524 = vadd.f32 %v499, 1.0
        %v525 = vadd.f32 %v501, 1.0
        %v526 = vadd.f32 %v503, 1.0
        %v527 = vadd.f32 %v505, 1.0
        %v528 = vadd.f32 %v507, 1.0
        %v529 = vadd.f32 %v509, 1.0
        %v530 = vadd.f32 %v511, 1.0
        %v531 = vadd.f32 %v513, 1.0
        %v532 = vadd.f32 %v515, 1.0
        %v533 = vadd.f32 %v517, 1.0
        %v534 = vlog2.pop %v518
        %v535 = vmul.f32 %v534, 0.6931472
        %v536 = vlog2.pop %v519
        %v537 = vmul.f32 %v536, 0.6931472
        %v538 = vlog2.pop %v520
        %v539 = vmul.f32 %v538, 0.6931472
        %v540 = vlog2.pop %v521
        %v541 = vmul.f32 %v540, 0.6931472
        %v542 = vlog2.pop %v522
        %v543 = vmul.f32 %v542, 0.6931472
        %v544 = vlog2.pop %v523
        %v545 = vmul.f32 %v544, 0.6931472
        %v546 = vlog2.pop %v524
        %v547 = vmul.f32 %v546, 0.6931472
        %v548 = vlog2.pop %v525
        %v549 = vmul.f32 %v548, 0.6931472
        %v550 = vlog2.pop %v526
        %v551 = vmul.f32 %v550, 0.6931472
        %v552 = vlog2.pop %v527
        %v553 = vmul.f32 %v552, 0.6931472
        %v554 = vlog2.pop %v528
        %v555 = vmul.f32 %v554, 0.6931472
        %v556 = vlog2.pop %v529
        %v557 = vmul.f32 %v556, 0.6931472
        %v558 = vlog2.pop %v530
        %v559 = vmul.f32 %v558, 0.6931472
        %v560 = vlog2.pop %v531
        %v561 = vmul.f32 %v560, 0.6931472
        %v562 = vlog2.pop %v532
        %v563 = vmul.f32 %v562, 0.6931472
        %v564 = vlog2.pop %v533
        %v565 = vmul.f32 %v564, 0.6931472
        %v566 = vadd.f32 %v438, %v535
        %v567 = vadd.f32 %v439, %v537
        %v568 = vadd.f32 %v440, %v539
        %v569 = vadd.f32 %v441, %v541
        %v570 = vadd.f32 %v442, %v543
        %v571 = vadd.f32 %v443, %v545
        %v572 = vadd.f32 %v444, %v547
        %v573 = vadd.f32 %v445, %v549
        %v574 = vadd.f32 %v446, %v551
        %v575 = vadd.f32 %v447, %v553
        %v576 = vadd.f32 %v448, %v555
        %v577 = vadd.f32 %v449, %v557
        %v578 = vadd.f32 %v450, %v559
        %v579 = vadd.f32 %v451, %v561
        %v580 = vadd.f32 %v452, %v563
        %v581 = vadd.f32 %v453, %v565
        %v582 = vld [vmem:[%s3] sm:$0xf]
        %v583 = vpack.c.bf16 %v570, %v566
        %v584 = vpack.c.bf16 %v571, %v567
        %v585 = vpack.c.bf16 %v572, %v568
        %v586 = vpack.c.bf16 %v573, %v569
        %v587 = vpack.c.bf16 %v578, %v574
        %v588 = vpack.c.bf16 %v579, %v575
        %v589 = vpack.c.bf16 %v580, %v576
        %v590 = vpack.c.bf16 %v581, %v577
        %v591 = vld [vmem:[%s4] sm:$0xff]
        %593 = vset.pattern.permute.xlu0 0
        %594 = vperm.xlu0 %593, %v591
        %v595 = vpop.permute.xlu0 %594
        %vm597 = vcmask 261120
        %v599 = vsel %vm597, %v582, 0
        %601 = vmatprep.subr.bf16.mxu0 %v584
        %602 = vmatpush1.bf16.msra.mxu0 %v583
        %603 = vmatprep.subr.bf16.mxu0 %v588
        %604 = vmatpush1.bf16.msra.mxu0 %v587
        %605 = vmatprep.subr.bf16.mxu0 0
        %606 = vmatpush1.bf16.msra.mxu0 0
        %607 = vmatprep.subr.bf16.mxu0 0
        %608 = vmatpush1.bf16.msra.mxu0 0
        %609 = vmatprep.subr.bf16.mxu0 0
        %610 = vmatpush1.bf16.msra.mxu0 0
        %611 = vmatprep.subr.bf16.mxu0 0
        %612 = vmatpush1.bf16.msra.mxu0 0
        %613 = vmatprep.subr.bf16.mxu0 0
        %614 = vmatpush1.bf16.msra.mxu0 0
        %615 = vmatprep.subr.bf16.mxu0 0
        %616 = vmatpush1.bf16.msra.mxu0 0
        %617 = vmatprep.subr.bf16.mxu0 0
        %618 = vmatpush1.bf16.msra.mxu0 0
        %619 = vmatprep.subr.bf16.mxu0 0
        %620 = vmatpush1.bf16.msra.mxu0 0
        %621 = vmatprep.subr.bf16.mxu0 0
        %622 = vmatpush1.bf16.msra.mxu0 0
        %623 = vmatprep.subr.bf16.mxu0 0
        %624 = vmatpush1.bf16.msra.mxu0 0
        %625 = vmatprep.subr.bf16.mxu0 0
        %626 = vmatpush1.bf16.msra.mxu0 0
        %627 = vmatprep.subr.bf16.mxu0 0
        %628 = vmatpush1.bf16.msra.mxu0 0
        %629 = vmatprep.subr.bf16.mxu0 0
        %630 = vmatpush1.bf16.msra.mxu0 0
        %631 = vmatprep.subr.bf16.mxu0 0
        %632 = vmatpush1.bf16.msra.mxu0 0
        %633 = vmatprep.mubr.bf16.mxu0 0
        %634 = vmatmul.mubr.bf16.gmra.mrb[0].mxu0 %v599
        %v635 = vpop.f32.mrb[0].mxu0
        %v636 = vadd.f32 %v595, %v635
        %v637 = vpop.f32.mrb[0].mxu0
        %v638 = vadd.f32 %v595, %v637
        %v639 = vpop.f32.mrb[0].mxu0
        %v640 = vpop.f32.mrb[0].mxu0
        %641 = vdwg.mxu0
        %642 = vmatprep.subr.bf16.mxu0 %v586
        %643 = vmatpush1.bf16.msra.mxu0 %v585
        %644 = vmatprep.subr.bf16.mxu0 %v590
        %645 = vmatpush1.bf16.msra.mxu0 %v589
        %646 = vmatprep.subr.bf16.mxu0 0
        %647 = vmatpush1.bf16.msra.mxu0 0
        %648 = vmatprep.subr.bf16.mxu0 0
        %649 = vmatpush1.bf16.msra.mxu0 0
        %650 = vmatprep.subr.bf16.mxu0 0
        %651 = vmatpush1.bf16.msra.mxu0 0
        %652 = vmatprep.subr.bf16.mxu0 0
        %653 = vmatpush1.bf16.msra.mxu0 0
        %654 = vmatprep.subr.bf16.mxu0 0
        %655 = vmatpush1.bf16.msra.mxu0 0
        %656 = vmatprep.subr.bf16.mxu0 0
        %657 = vmatpush1.bf16.msra.mxu0 0
        %658 = vmatprep.subr.bf16.mxu0 0
        %659 = vmatpush1.bf16.msra.mxu0 0
        %660 = vmatprep.subr.bf16.mxu0 0
        %661 = vmatpush1.bf16.msra.mxu0 0
        %662 = vmatprep.subr.bf16.mxu0 0
        %663 = vmatpush1.bf16.msra.mxu0 0
        %664 = vmatprep.subr.bf16.mxu0 0
        %665 = vmatpush1.bf16.msra.mxu0 0
        %666 = vmatprep.subr.bf16.mxu0 0
        %667 = vmatpush1.bf16.msra.mxu0 0
        %668 = vmatprep.subr.bf16.mxu0 0
        %669 = vmatpush1.bf16.msra.mxu0 0
        %670 = vmatprep.subr.bf16.mxu0 0
        %671 = vmatpush1.bf16.msra.mxu0 0
        %672 = vmatprep.subr.bf16.mxu0 0
        %673 = vmatpush1.bf16.msra.mxu0 0
        %674 = vmatprep.mubr.bf16.mxu0 0
        %675 = vmatmul.mubr.bf16.gmra.mrb[0].mxu0 %v599
        %v676 = vpop.f32.mrb[0].mxu0
        %v677 = vadd.f32 %v595, %v676
        %v678 = vpop.f32.mrb[0].mxu0
        %v679 = vadd.f32 %v595, %v678
        %v680 = vpop.f32.mrb[0].mxu0
        %v681 = vpop.f32.mrb[0].mxu0
        %682 = vdwg.mxu0
        %v683 = vsub.f32 0.0, %v636
        %v684 = vsub.f32 0.0, %v638
        %v685 = vsub.f32 0.0, %v677
        %v686 = vsub.f32 0.0, %v679
        %v687 = vmul.f32 %v683, 1.442695
        %v688 = vpow.pop %v687
        %v689 = vmul.f32 %v684, 1.442695
        %v690 = vpow.pop %v689
        %v691 = vmul.f32 %v685, 1.442695
        %v692 = vpow.pop %v691
        %v693 = vmul.f32 %v686, 1.442695
        %v694 = vpow.pop %v693
        %v695 = vadd.f32 %v688, 1.0
        %v696 = vadd.f32 %v690, 1.0
        %v697 = vadd.f32 %v692, 1.0
        %v698 = vadd.f32 %v694, 1.0
        %v699 = vrcp.pop %v695
        %v700 = vmul.f32 1.0, %v699
        %v701 = vrcp.pop %v696
        %v702 = vmul.f32 1.0, %v701
        %v703 = vrcp.pop %v697
        %v704 = vmul.f32 1.0, %v703
        %v705 = vrcp.pop %v698
        %v706 = vmul.f32 1.0, %v705
        %v707 = vmul.f32 %v700, 1.002
        %v708 = vmul.f32 %v702, 1.002
        %v709 = vmul.f32 %v704, 1.002
        %v710 = vmul.f32 %v706, 1.002
        %v711 = vsub.f32 %v707, 0.001
        %v712 = vsub.f32 %v708, 0.001
        %v713 = vsub.f32 %v709, 0.001
        %v714 = vsub.f32 %v710, 0.001
        %v715 = vlaneseq
        %v716 = vshrl.u32 %v715, 7
        %vm717 = vcmp.eq.s32.totalorder %v716, 0
        %v718 = vsel %vm717, %v636, %v711
        %v719 = vsel %vm717, %v638, %v712
        %v720 = vsel %vm717, %v677, %v713
        %v721 = vsel %vm717, %v679, %v714
        %722 = vst [vmem:[%s258] sm:$0xff] %v718
        %723 = vst [vmem:[%s258 + $0x8] sm:$0xff] %v719
        %724 = vst [vmem:[%s258 + $0x10] sm:$0xff] %v720
        %725 = vst [vmem:[%s258 + $0x18] sm:$0xff] %v721
        %s726 = sand.u32 %s156, 1
        %s727 = scalar_lea.sflag [#allocation4], %s726
        %s728 = sand.u32 %s156, 1
        %s729 = smul.addr %s728, 32
        %s730 = scalar_lea.vmem [#allocation5], %s729
        // Predicated region
        $region45: #{tpu_custom_call.1} parent=39 // pred_check
          %p731 = pneg %p166
        $region46: #{tpu_custom_call.1} parent=39 // pred_check_branch
          %733 = sbr.rel (%p731) target = $region48
        $region47: #{tpu_custom_call.1} parent=39 // pred_region
          %s734 = smul.u32 4, %s27
          %s736 = ssub.s32 512, 512
          %737 = vsyncadd %s727, %s736
          %s738 = smul.addr %s26, 12
          %s739 = sadd.s32 %s734, %s738
          %s740 = smul.addr %s739, 128
          %s741 = scalar_lea.hbm %s5, %s740
          %s743 = sshll.u32 %s730, 4
          %s744 = int_to_ptr.vmem [resolvable:$true] %s743
          %746 = dma.vmem_to_hbm [thread:$0]  %s744, 512, %s741, %s727
        $region48: #{tpu_custom_call.1} parent=39 // pred_fallthru
          _
      $region40: #{tpu_custom_call.1} parent=5 // pred_fallthru
        _
      %p747 = scmp.le.s32.totalorder 2, %s17
      // Predicated region
      $region49: #{tpu_custom_call.1} parent=5 // pred_check
        %p748 = pneg %p747
      $region50: #{tpu_custom_call.1} parent=5 // pred_check_branch
        %750 = sbr.rel (%p748) target = $region52
      $region51: #{tpu_custom_call.1} parent=5 // pred_region
        %s751 = ssub.s32 %s17, 2
        // Predicated region
        $region53: #{tpu_custom_call.1} parent=51 // pred_check
          %p752 = pneg %p172
        $region54: #{tpu_custom_call.1} parent=51 // pred_check_branch
          %754 = sbr.rel (%p752) target = $region56
        $region55: #{tpu_custom_call.1} parent=51 // pred_region
          %s755 = sand.u32 %s157, 1
          %s756 = scalar_lea.sflag [#allocation4], %s755
          %s757 = sand.u32 %s157, 1
          %s758 = smul.addr %s757, 32
          %s759 = scalar_lea.vmem [#allocation5], %s758
          %760 = dma.done %s756, 512
        $region56: #{tpu_custom_call.1} parent=51 // pred_fallthru
          _
      $region52: #{tpu_custom_call.1} parent=5 // pred_fallthru
        _
    $region6: #{tpu_custom_call.1} parent=1 // loop_footer
      %s21 = sadd.s32 1, %s17
    $region7: #{tpu_custom_call.1} parent=1 // loop_footer_branch
      %16 = sbr.rel target = $region3
    $region8: #{tpu_custom_call.1} parent=1 // loop_exit
      _
    %761 = vsyncpa [#allocation3], 1
    %s762 = scalar_lea.sflag [#allocation3], 1
    %763 = vsyncpa %s762, 1
    %764 = vsyncpa [#allocation4], 1
    %s765 = scalar_lea.sflag [#allocation4], 1
    %766 = vsyncpa %s765, 1

</llo_original>
